<compile_context>
chip_gen: v7x
topology: tpu7x:2x2x1
jax: 0.10.0
libtpu: 0.0.40
codegen_flags: <defaults>
</compile_context>

<pallas_src>
import jax
import jax.numpy as jnp
import numpy as np
from jax.experimental import pallas as pl
from jax.experimental.pallas import tpu as pltpu

# ---------------------------------------------------------------------------
# Problem sizes (small, consistent with the module)
# ---------------------------------------------------------------------------
N = 2          # batch
C = 8          # planes (input channels)
CH = 8         # hidden_planes
COUT = 8       # out_planes
H = W = 16     # spatial
HW = H * W
LANES = N * HW            # 512: batch fused into the lane axis
DILS = (6, 12, 18)
NEG_SLOPE = 0.1
BN_EPS = 1e-5

# The d=18 "centre tap only" simplification is valid only when the off-centre
# taps fall entirely inside the zero padding:
assert DILS[2] >= H and DILS[2] >= W
assert CH == COUT          # needed for the packed "small" operand below

# Row (K) layout of the per-call input slab:
#   [0, C)           centre pixels          (branch 0, branch 3 centre tap, pool)
#   [C, C+9C)        9 taps of d=6  branch  (tap-major, row-major (ky,kx))
#   [C+9C, C+18C)    9 taps of d=12 branch
#   [KBIG]           ones row (first-stage bias folded into the matmul)
#   [KBIG+1, KPAD)   zero rows (sublane padding)
KBIG = C + 9 * C + 9 * C          # 152
KPAD = KBIG + 8                   # 160
NB = 4                            # branches 0..3 fused into one block matmul

# packed "small" ref column layout: [ w4T (C) | b4s (1) | wo4 (CH) | bo (1) ]
SMALL_W = C + 1 + CH + 1          # 18


# ---------------------------------------------------------------------------
# Pallas kernel: single grid step, whole batch in lanes.
# ---------------------------------------------------------------------------
def aspp_kernel(xbig_ref,   # (KPAD, LANES)   bf16  im2col'd input + ones row
                wbig_ref,   # (NB*CH, KPAD)   bf16  fused branch weights + bias col
                wo03_ref,   # (COUT, NB*CH)   bf16  out_proj weights, branches 0-3
                small_ref,  # (CH, SMALL_W)   f32   [w4T | b4s | wo4 | bo]
                out_ref):   # (COUT, LANES)   f32
    xbig = xbig_ref[...]                                            # (160, 512) bf16

    # --- branches 0-3 (+ folded BN shift): one block-structured bf16 matmul --
    hid = jnp.dot(wbig_ref[...], xbig, preferred_element_type=jnp.float32)
    hid = jnp.maximum(hid, NEG_SLOPE * hid)                         # LeakyReLU, (32, 512) f32

    # --- out_proj contribution of branches 0-3 -------------------------------
    out = jnp.dot(wo03_ref[...], hid.astype(jnp.bfloat16),
                  preferred_element_type=jnp.float32)               # (COUT, 512) f32

    # --- pooled branch: spatially constant -> pure column math per image -----
    small = small_ref[...]
    w4T = small[:, 0:C]                                             # (CH, C)
    b4s = small[:, C:C + 1]                                         # (CH, 1)
    wo4 = small[:, C + 1:C + 1 + CH]                                # (COUT, CH)
    bo = small[:, C + 1 + CH:C + 2 + CH]                            # (COUT, 1)

    xc = xbig[0:C, :].astype(jnp.float32)                           # centre pixels, f32
    pooled = jnp.concatenate(
        [jnp.mean(xc[:, i * HW:(i + 1) * HW], axis=1, keepdims=True)
         for i in range(N)], axis=1)                                # (C, N) per-image means
    b4 = jnp.dot(w4T, pooled, preferred_element_type=jnp.float32) + b4s
    b4 = jnp.maximum(b4, NEG_SLOPE * b4)                            # (CH, N)
    col = jnp.dot(wo4, b4, preferred_element_type=jnp.float32) + bo  # (COUT, N), bo folded

    # --- add per-image constant column; lane-aligned dense stores ------------
    for i in range(N):
        out_ref[:, i * HW:(i + 1) * HW] = (
            out[:, i * HW:(i + 1) * HW] + col[:, i:i + 1]).astype(out_ref.dtype)


# ---------------------------------------------------------------------------
# Wrapper: im2col (batch-in-lanes) + BN folding, then one pallas_call.
# ---------------------------------------------------------------------------
def _im2col_lanes(x):
    """(N, C, H, W) -> (KBIG, N*HW); image i occupies lanes [i*HW, (i+1)*HW)."""
    n, c, h, w = x.shape
    blocks = [x.reshape(n, c, h * w)]
    for d in DILS[:2]:
        xp = jnp.pad(x, ((0, 0), (0, 0), (d, d), (d, d)))
        for ky in range(3):
            for kx in range(3):
                sl = xp[:, :, ky * d:ky * d + h, kx * d:kx * d + w]
                blocks.append(sl.reshape(n, c, h * w))
    big = jnp.concatenate(blocks, axis=1)                 # (N, KBIG, HW)
    return jnp.transpose(big, (1, 0, 2)).reshape(KBIG, n * h * w)


@jax.jit
def aspp_decoder_pallas(x_nchw, w0, w1, w2, w3, w4, wout, bout, bn_scale, bn_shift):
    # ---- im2col + ones/zero rows for the bias fold (bf16 halves DMA bytes) --
    xbig = _im2col_lanes(x_nchw)                          # (KBIG, LANES) f32
    xbig_aug = jnp.concatenate([
        xbig,
        jnp.ones((1, LANES), jnp.float32),
        jnp.zeros((KPAD - KBIG - 1, LANES), jnp.float32),
    ], axis=0).astype(jnp.bfloat16)                       # (KPAD, LANES) bf16

    # ---- fold BN (eval) into weights / per-channel shifts --------------------
    def foldT(w, s):                 # (Cin, CH) -> (CH, Cin), BN scale folded
        return (w * s[None, :]).T

    def fold_taps(w9, s):            # (9, Cin, CH) -> (CH, 9*Cin), tap-major cols
        return jnp.transpose(w9, (2, 0, 1)).reshape(CH, 9 * C) * s[:, None]

    z_c = jnp.zeros((CH, C), jnp.float32)
    z_t = jnp.zeros((CH, 9 * C), jnp.float32)
    wbigT = jnp.concatenate([
        jnp.concatenate([foldT(w0, bn_scale[0]), z_t, z_t], axis=1),      # branch 0 (1x1)
        jnp.concatenate([z_c, fold_taps(w1, bn_scale[1]), z_t], axis=1),  # branch 1 (d=6)
        jnp.concatenate([z_c, z_t, fold_taps(w2, bn_scale[2])], axis=1),  # branch 2 (d=12)
        jnp.concatenate([foldT(w3[4], bn_scale[3]), z_t, z_t], axis=1),   # branch 3 (d=18, centre)
    ], axis=0)                                                            # (NB*CH, KBIG)
    bbig = bn_shift[:NB].reshape(NB * CH, 1)
    wbig_aug = jnp.concatenate([
        wbigT, bbig, jnp.zeros((NB * CH, KPAD - KBIG - 1), jnp.float32),
    ], axis=1).astype(jnp.bfloat16)                                       # (NB*CH, KPAD)

    woutT = wout.T                                                        # (COUT, 5*CH)
    wo03 = woutT[:, :NB * CH].astype(jnp.bfloat16)                        # (COUT, NB*CH)
    small = jnp.concatenate([
        foldT(w4, bn_scale[4]),                   # w4T (CH, C)
        bn_shift[4].reshape(CH, 1),               # b4s (CH, 1)
        woutT[:, NB * CH:],                       # wo4 (COUT, CH)
        bout.reshape(COUT, 1),                    # bo  (COUT, 1)
    ], axis=1)                                                            # (CH, SMALL_W) f32

    def full(shape):
        return pl.BlockSpec(shape, lambda i: (0,) * len(shape))

    cost = pl.CostEstimate(
        flops=2 * (NB * CH * KPAD + COUT * NB * CH) * LANES,
        transcendentals=0,
        bytes_accessed=(KPAD * LANES * 2 + NB * CH * KPAD * 2
                        + COUT * NB * CH * 2 + CH * SMALL_W * 4
                        + COUT * LANES * 4))

    out_flat = pl.pallas_call(
        aspp_kernel,
        out_shape=jax.ShapeDtypeStruct((COUT, LANES), jnp.float32),
        grid=(1,),
        in_specs=[full((KPAD, LANES)),
                  full((NB * CH, KPAD)),
                  full((COUT, NB * CH)),
                  full((CH, SMALL_W))],
        out_specs=full((COUT, LANES)),
        compiler_params=pltpu.CompilerParams(
            dimension_semantics=("arbitrary",)),
        cost_estimate=cost,
    )(xbig_aug, wbig_aug, wo03, small)

    # (COUT, N*HW) -> native NCHW
    return jnp.transpose(out_flat.reshape(COUT, N, HW), (1, 0, 2)).reshape(N, COUT, H, W)


# ---------------------------------------------------------------------------
# Pure-JAX reference (same math, via lax.conv_general_dilated, NCHW, f32)
# ---------------------------------------------------------------------------
def aspp_decoder_ref(x_nchw, w0, w1, w2, w3, w4, wout, bout, bn_scale, bn_shift):
    def act(y, idx):
        y = y * bn_scale[idx][None, :, None, None] + bn_shift[idx][None, :, None, None]
        return jnp.where(y > 0, y, NEG_SLOPE * y)

    def conv1x1(x, w):
        return jnp.einsum('nchw,cd->ndhw', x, w)

    def conv3x3_dil(x, w9, d):
        w = w9.reshape(3, 3, C, CH)   # HWIO; tap order matches _im2col_lanes
        return jax.lax.conv_general_dilated(
            x, w, window_strides=(1, 1), padding=((d, d), (d, d)),
            rhs_dilation=(d, d), dimension_numbers=('NCHW', 'HWIO', 'NCHW'))

    b0 = act(conv1x1(x_nchw, w0), 0)
    b1 = act(conv3x3_dil(x_nchw, w1, DILS[0]), 1)
    b2 = act(conv3x3_dil(x_nchw, w2, DILS[1]), 2)
    b3 = act(conv3x3_dil(x_nchw, w3, DILS[2]), 3)
    pooled = jnp.mean(x_nchw, axis=(2, 3), keepdims=True)        # (N, C, 1, 1)
    b4 = act(conv1x1(pooled, w4), 4)
    b4 = jnp.broadcast_to(b4, (N, CH, H, W))                     # .repeat(1,1,h,w)
    cat = jnp.concatenate([b0, b1, b2, b3, b4], axis=1)          # (N, 5*CH, H, W)
    out = jnp.einsum('nchw,cd->ndhw', cat, wout)
    return out + bout[0][None, :, None, None]


# ---------------------------------------------------------------------------
if __name__ == "__main__":
    key = jax.random.PRNGKey(0)
    ks = jax.random.split(key, 12)

    # input in PyTorch-native NCHW
    x_nchw = jax.random.normal(ks[0], (N, C, H, W), jnp.float32)

    s = 0.3
    w0 = jax.random.normal(ks[1], (C, CH), jnp.float32) * s
    w1 = jax.random.normal(ks[2], (9, C, CH), jnp.float32) * (s / 3)
    w2 = jax.random.normal(ks[3], (9, C, CH), jnp.float32) * (s / 3)
    w3 = jax.random.normal(ks[4], (9, C, CH), jnp.float32) * (s / 3)
    w4 = jax.random.normal(ks[5], (C, CH), jnp.float32) * s
    wout = jax.random.normal(ks[6], (5 * CH, COUT), jnp.float32) * s
    bout = jax.random.normal(ks[7], (1, COUT), jnp.float32) * 0.1

    # BatchNorm (eval) parameters, folded to per-channel scale/shift per branch
    gamma = 1.0 + 0.1 * jax.random.normal(ks[8], (5, CH), jnp.float32)
    beta = 0.1 * jax.random.normal(ks[9], (5, CH), jnp.float32)
    rmean = 0.1 * jax.random.normal(ks[10], (5, CH), jnp.float32)
    rvar = jnp.abs(1.0 + 0.1 * jax.random.normal(ks[11], (5, CH), jnp.float32))
    bn_scale = gamma / jnp.sqrt(rvar + BN_EPS)
    bn_shift = beta - rmean * bn_scale

    args = (x_nchw, w0, w1, w2, w3, w4, wout, bout, bn_scale, bn_shift)

    out = jax.block_until_ready(aspp_decoder_pallas(*args))
    ref = jax.block_until_ready(aspp_decoder_ref(*args))
    # bf16 matmul operands with f32 accumulation -> slightly looser tolerance
    np.testing.assert_allclose(np.asarray(out), np.asarray(ref),
                               rtol=3e-2, atol=3e-2)

    print("KERNEL_OK")
</pallas_src>

<mosaic_0001>
module attributes {stable_mosaic.version = 11 : i64} {
  func.func @aspp_kernel(%arg0: i32, %arg1: memref<160x512xbf16, #tpu.memory_space<vmem>>, %arg2: memref<32x160xbf16, #tpu.memory_space<vmem>>, %arg3: memref<8x32xbf16, #tpu.memory_space<vmem>>, %arg4: memref<8x18xf32, #tpu.memory_space<vmem>>, %arg5: memref<8x512xf32, #tpu.memory_space<vmem>>) attributes {dimension_semantics = [#tpu.dimension_semantics<arbitrary>], iteration_bounds = array<i64: 1>, scalar_prefetch = 0 : i64, scratch_operands = 0 : i64, tpu.core_type = #tpu.core_type<tc>, window_params = [{pipeline_mode = #tpu.pipeline_mode<synchronous>, transform_indices = @transform_0, window_bounds = array<i64: 160, 512>}, {pipeline_mode = #tpu.pipeline_mode<synchronous>, transform_indices = @transform_1, window_bounds = array<i64: 32, 160>}, {pipeline_mode = #tpu.pipeline_mode<synchronous>, transform_indices = @transform_2, window_bounds = array<i64: 8, 32>}, {pipeline_mode = #tpu.pipeline_mode<synchronous>, transform_indices = @transform_3, window_bounds = array<i64: 8, 18>}, {pipeline_mode = #tpu.pipeline_mode<synchronous>, transform_indices = @transform_4, window_bounds = array<i64: 8, 512>}]} {
    %c0 = arith.constant 0 : index
    %c0_0 = arith.constant 0 : index
    %0 = vector.load %arg1[%c0, %c0_0] : memref<160x512xbf16, #tpu.memory_space<vmem>>, vector<160x512xbf16>
    %c0_1 = arith.constant 0 : index
    %c0_2 = arith.constant 0 : index
    %1 = vector.load %arg2[%c0_1, %c0_2] : memref<32x160xbf16, #tpu.memory_space<vmem>>, vector<32x160xbf16>
    %cst = arith.constant dense<0.000000e+00> : vector<32x512xf32>
    %2 = tpu.matmul %1, %0, %cst {dimension_numbers = #tpu.dot_dimension_numbers<[1], [0], [0], [1], [0, 0, 1, 1], [], []>} : vector<32x160xbf16>, vector<160x512xbf16>, vector<32x512xf32> -> vector<32x512xf32>
    %cst_3 = arith.constant 1.000000e-01 : f32
    %3 = vector.broadcast %cst_3 : f32 to vector<32x512xf32>
    %4 = arith.mulf %3, %2 : vector<32x512xf32>
    %5 = arith.maximumf %2, %4 : vector<32x512xf32>
    %c0_4 = arith.constant 0 : index
    %c0_5 = arith.constant 0 : index
    %6 = vector.load %arg3[%c0_4, %c0_5] : memref<8x32xbf16, #tpu.memory_space<vmem>>, vector<8x32xbf16>
    %7 = arith.truncf %5 : vector<32x512xf32> to vector<32x512xbf16>
    %cst_6 = arith.constant dense<0.000000e+00> : vector<8x512xf32>
    %8 = tpu.matmul %6, %7, %cst_6 {dimension_numbers = #tpu.dot_dimension_numbers<[1], [0], [0], [1], [0, 0, 1, 1], [], []>} : vector<8x32xbf16>, vector<32x512xbf16>, vector<8x512xf32> -> vector<8x512xf32>
    %c0_7 = arith.constant 0 : index
    %c0_8 = arith.constant 0 : index
    %9 = vector.load %arg4[%c0_7, %c0_8] : memref<8x18xf32, #tpu.memory_space<vmem>>, vector<8x18xf32>
    %10 = vector.extract_strided_slice %9 {offsets = [0, 0], sizes = [8, 8], strides = [1, 1]} : vector<8x18xf32> to vector<8x8xf32>
    %11 = vector.extract_strided_slice %9 {offsets = [0, 8], sizes = [8, 1], strides = [1, 1]} : vector<8x18xf32> to vector<8x1xf32>
    %12 = vector.extract_strided_slice %9 {offsets = [0, 9], sizes = [8, 8], strides = [1, 1]} : vector<8x18xf32> to vector<8x8xf32>
    %13 = vector.extract_strided_slice %9 {offsets = [0, 17], sizes = [8, 1], strides = [1, 1]} : vector<8x18xf32> to vector<8x1xf32>
    %14 = vector.extract_strided_slice %0 {offsets = [0, 0], sizes = [8, 512], strides = [1, 1]} : vector<160x512xbf16> to vector<8x512xbf16>
    %15 = arith.extf %14 : vector<8x512xbf16> to vector<8x512xf32>
    %16 = vector.extract_strided_slice %15 {offsets = [0, 0], sizes = [8, 256], strides = [1, 1]} : vector<8x512xf32> to vector<8x256xf32>
    %cst_9 = arith.constant dense<0.000000e+00> : vector<8xf32>
    %17 = vector.multi_reduction <add>, %16, %cst_9 [1] : vector<8x256xf32> to vector<8xf32>
    %18 = vector.shape_cast %17 : vector<8xf32> to vector<8x1xf32>
    %cst_10 = arith.constant 2.560000e+02 : f32
    %19 = vector.broadcast %cst_10 : f32 to vector<8x1xf32>
    %20 = arith.divf %18, %19 : vector<8x1xf32>
    %21 = vector.extract_strided_slice %15 {offsets = [0, 256], sizes = [8, 256], strides = [1, 1]} : vector<8x512xf32> to vector<8x256xf32>
    %cst_11 = arith.constant dense<0.000000e+00> : vector<8xf32>
    %22 = vector.multi_reduction <add>, %21, %cst_11 [1] : vector<8x256xf32> to vector<8xf32>
    %23 = vector.shape_cast %22 : vector<8xf32> to vector<8x1xf32>
    %cst_12 = arith.constant 2.560000e+02 : f32
    %24 = vector.broadcast %cst_12 : f32 to vector<8x1xf32>
    %25 = arith.divf %23, %24 : vector<8x1xf32>
    %26 = tpu.concatenate %20, %25 in 1 : vector<8x1xf32>, vector<8x1xf32> -> vector<8x2xf32>
    %cst_13 = arith.constant dense<0.000000e+00> : vector<8x2xf32>
    %27 = tpu.matmul %10, %26, %cst_13 {dimension_numbers = #tpu.dot_dimension_numbers<[1], [0], [0], [1], [0, 0, 1, 1], [], []>} : vector<8x8xf32>, vector<8x2xf32>, vector<8x2xf32> -> vector<8x2xf32>
    %28 = vector.broadcast %11 : vector<8x1xf32> to vector<8x2xf32>
    %29 = arith.addf %27, %28 : vector<8x2xf32>
    %cst_14 = arith.constant 1.000000e-01 : f32
    %30 = vector.broadcast %cst_14 : f32 to vector<8x2xf32>
    %31 = arith.mulf %30, %29 : vector<8x2xf32>
    %32 = arith.maximumf %29, %31 : vector<8x2xf32>
    %cst_15 = arith.constant dense<0.000000e+00> : vector<8x2xf32>
    %33 = tpu.matmul %12, %32, %cst_15 {dimension_numbers = #tpu.dot_dimension_numbers<[1], [0], [0], [1], [0, 0, 1, 1], [], []>} : vector<8x8xf32>, vector<8x2xf32>, vector<8x2xf32> -> vector<8x2xf32>
    %34 = vector.broadcast %13 : vector<8x1xf32> to vector<8x2xf32>
    %35 = arith.addf %33, %34 : vector<8x2xf32>
    %36 = vector.extract_strided_slice %8 {offsets = [0, 0], sizes = [8, 256], strides = [1, 1]} : vector<8x512xf32> to vector<8x256xf32>
    %37 = vector.extract_strided_slice %35 {offsets = [0, 0], sizes = [8, 1], strides = [1, 1]} : vector<8x2xf32> to vector<8x1xf32>
    %38 = vector.broadcast %37 : vector<8x1xf32> to vector<8x256xf32>
    %39 = arith.addf %36, %38 : vector<8x256xf32>
    %c0_16 = arith.constant 0 : index
    %c0_17 = arith.constant 0 : index
    %40 = vector.load %arg5[%c0_16, %c0_17] : memref<8x512xf32, #tpu.memory_space<vmem>>, vector<8x256xf32>
    tpu.vector_store %arg5[%c0_16, %c0_17], %39 {strides = array<i32>} : memref<8x512xf32, #tpu.memory_space<vmem>>, vector<8x256xf32>,
    %41 = vector.extract_strided_slice %8 {offsets = [0, 256], sizes = [8, 256], strides = [1, 1]} : vector<8x512xf32> to vector<8x256xf32>
    %42 = vector.extract_strided_slice %35 {offsets = [0, 1], sizes = [8, 1], strides = [1, 1]} : vector<8x2xf32> to vector<8x1xf32>
    %43 = vector.broadcast %42 : vector<8x1xf32> to vector<8x256xf32>
    %44 = arith.addf %41, %43 : vector<8x256xf32>
    %c0_18 = arith.constant 0 : index
    %c256 = arith.constant 256 : index
    %45 = vector.load %arg5[%c0_18, %c256] : memref<8x512xf32, #tpu.memory_space<vmem>>, vector<8x256xf32>
    tpu.vector_store %arg5[%c0_18, %c256], %44 {strides = array<i32>} : memref<8x512xf32, #tpu.memory_space<vmem>>, vector<8x256xf32>,
    return
  }
  func.func @transform_0(%arg0: i32) -> (i32, i32) {
    %c0_i32 = arith.constant 0 : i32
    %c0_i32_0 = arith.constant 0 : i32
    %c0_i32_1 = arith.constant 0 : i32
    return %c0_i32, %c0_i32_0 : i32, i32
  }
  func.func @transform_1(%arg0: i32) -> (i32, i32) {
    %c0_i32 = arith.constant 0 : i32
    %c0_i32_0 = arith.constant 0 : i32
    %c0_i32_1 = arith.constant 0 : i32
    return %c0_i32, %c0_i32_0 : i32, i32
  }
  func.func @transform_2(%arg0: i32) -> (i32, i32) {
    %c0_i32 = arith.constant 0 : i32
    %c0_i32_0 = arith.constant 0 : i32
    %c0_i32_1 = arith.constant 0 : i32
    return %c0_i32, %c0_i32_0 : i32, i32
  }
  func.func @transform_3(%arg0: i32) -> (i32, i32) {
    %c0_i32 = arith.constant 0 : i32
    %c0_i32_0 = arith.constant 0 : i32
    %c0_i32_1 = arith.constant 0 : i32
    return %c0_i32, %c0_i32_0 : i32, i32
  }
  func.func @transform_4(%arg0: i32) -> (i32, i32) {
    %c0_i32 = arith.constant 0 : i32
    %c0_i32_0 = arith.constant 0 : i32
    %c0_i32_1 = arith.constant 0 : i32
    return %c0_i32, %c0_i32_0 : i32, i32
  }
}

</mosaic_0001>

<llo_original>
// kernel: aspp_decoder_pallas.1
$region0: #{aspp_decoder_pallas.1}
  #allocation0 [shape = 'u32[]', space=smem, size = 0x4, offset = 0x4, fixed_abs, tag = 'smem constant byte address 0x4 - core index']
  #allocation1 [shape = 'u32[144,128]{1,0:T(1,128)}', space=vmem, size = 0x12000, scoped, tag = 'internal scratch']
  %s0 = inlined_call_operand.vmem [shape: bf16[160,512], index: 0, kind: input, shape index: {}]
  %s1 = inlined_call_operand.vmem [shape: bf16[32,160], index: 1, kind: input, shape index: {}]
  %s2 = inlined_call_operand.vmem [shape: bf16[8,32], index: 2, kind: input, shape index: {}]
  %s3 = inlined_call_operand.vmem [shape: f32[8,18], index: 3, kind: input, shape index: {}]
  %s4 = inlined_call_operand.vmem [shape: f32[8,512], index: 4, kind: output, shape index: {}]
  %s5 = sld [smem:[#allocation0]]
  $region26: #{aspp_decoder_pallas.1} parent=0
    _
  %s7 = ssub.s32 1, %s5
  %s8 = scalar_select 0, %s7, %s5
  // Predicated region
  $region2: #{aspp_decoder_pallas.1} parent=0 // pred_check
    _
  $region3: #{aspp_decoder_pallas.1} parent=0 // pred_check_branch
    %10 = sbr.rel (0) target = $region5
  $region4: #{aspp_decoder_pallas.1} parent=0 // pred_region
    _
  $region5: #{aspp_decoder_pallas.1} parent=0 // pred_fallthru
    _
  // Predicated region
  $region6: #{aspp_decoder_pallas.1} parent=0 // pred_check
    _
  $region7: #{aspp_decoder_pallas.1} parent=0 // pred_check_branch
    %12 = sbr.rel (0) target = $region9
  $region8: #{aspp_decoder_pallas.1} parent=0 // pred_region
    _
  $region9: #{aspp_decoder_pallas.1} parent=0 // pred_fallthru
    _
  // Predicated region
  $region10: #{aspp_decoder_pallas.1} parent=0 // pred_check
    _
  $region11: #{aspp_decoder_pallas.1} parent=0 // pred_check_branch
    %14 = sbr.rel (0) target = $region13
  $region12: #{aspp_decoder_pallas.1} parent=0 // pred_region
    _
  $region13: #{aspp_decoder_pallas.1} parent=0 // pred_fallthru
    _
  // Predicated region
  $region14: #{aspp_decoder_pallas.1} parent=0 // pred_check
    _
  $region15: #{aspp_decoder_pallas.1} parent=0 // pred_check_branch
    %16 = sbr.rel (0) target = $region17
  $region16: #{aspp_decoder_pallas.1} parent=0 // pred_region
    _
  $region17: #{aspp_decoder_pallas.1} parent=0 // pred_fallthru
    _
  %v18 = vld [vmem:[%s0] sm:$0xff]
  %v19 = vld [vmem:[%s0 + $0x8] sm:$0xff]
  %v20 = vld [vmem:[%s0 + $0x10] sm:$0xff]
  %v21 = vld [vmem:[%s0 + $0x18] sm:$0xff]
  %v22 = vld [vmem:[%s0 + $0x20] sm:$0xff]
  %v23 = vld [vmem:[%s0 + $0x28] sm:$0xff]
  %v24 = vld [vmem:[%s0 + $0x30] sm:$0xff]
  %v25 = vld [vmem:[%s0 + $0x38] sm:$0xff]
  %v26 = vld [vmem:[%s0 + $0x40] sm:$0xff]
  %v27 = vld [vmem:[%s0 + $0x48] sm:$0xff]
  %v28 = vld [vmem:[%s0 + $0x50] sm:$0xff]
  %v29 = vld [vmem:[%s0 + $0x58] sm:$0xff]
  %v30 = vld [vmem:[%s0 + $0x60] sm:$0xff]
  %v31 = vld [vmem:[%s0 + $0x68] sm:$0xff]
  %v32 = vld [vmem:[%s0 + $0x70] sm:$0xff]
  %v33 = vld [vmem:[%s0 + $0x78] sm:$0xff]
  %v34 = vld [vmem:[%s0 + $0x80] sm:$0xff]
  %v35 = vld [vmem:[%s0 + $0x88] sm:$0xff]
  %v36 = vld [vmem:[%s0 + $0x90] sm:$0xff]
  %v37 = vld [vmem:[%s0 + $0x98] sm:$0xff]
  %v38 = vld [vmem:[%s0 + $0xa0] sm:$0xff]
  %v39 = vld [vmem:[%s0 + $0xa8] sm:$0xff]
  %v40 = vld [vmem:[%s0 + $0xb0] sm:$0xff]
  %v41 = vld [vmem:[%s0 + $0xb8] sm:$0xff]
  %v42 = vld [vmem:[%s0 + $0xc0] sm:$0xff]
  %v43 = vld [vmem:[%s0 + $0xc8] sm:$0xff]
  %v44 = vld [vmem:[%s0 + $0xd0] sm:$0xff]
  %v45 = vld [vmem:[%s0 + $0xd8] sm:$0xff]
  %v46 = vld [vmem:[%s0 + $0xe0] sm:$0xff]
  %v47 = vld [vmem:[%s0 + $0xe8] sm:$0xff]
  %v48 = vld [vmem:[%s0 + $0xf0] sm:$0xff]
  %v49 = vld [vmem:[%s0 + $0xf8] sm:$0xff]
  %v50 = vld [vmem:[%s0 + $0x100] sm:$0xff]
  %v51 = vld [vmem:[%s0 + $0x108] sm:$0xff]
  %v52 = vld [vmem:[%s0 + $0x110] sm:$0xff]
  %v53 = vld [vmem:[%s0 + $0x118] sm:$0xff]
  %v54 = vld [vmem:[%s0 + $0x120] sm:$0xff]
  %v55 = vld [vmem:[%s0 + $0x128] sm:$0xff]
  %v56 = vld [vmem:[%s0 + $0x130] sm:$0xff]
  %v57 = vld [vmem:[%s0 + $0x138] sm:$0xff]
  %v58 = vld [vmem:[%s1] sm:$0xff]
  %v59 = vld [vmem:[%s1 + $0x8] sm:$0xff]
  %v60 = vld [vmem:[%s1 + $0x10] sm:$0xff]
  %v61 = vld [vmem:[%s1 + $0x18] sm:$0xff]
  %v66 = vunpack.c.l.b16 %v58
  %v67 = vunpack.c.h.b16 %v58
  %v68 = vunpack.c.l.b16 %v59
  %v69 = vunpack.c.h.b16 %v59
  %v70 = vunpack.c.l.b16 %v60
  %v71 = vunpack.c.h.b16 %v60
  %v72 = vunpack.c.l.b16 %v61
  %v73 = vunpack.c.h.b16 %v61
  %v74 = vpack.c.b16 %v68, %v66
  %v75 = vpack.c.b16 %v69, %v67
  %v76 = vpack.c.b16 %v72, %v70
  %v77 = vpack.c.b16 %v73, %v71
  %v120 = vunpack.c.l.b16 %v18
  %v121 = vunpack.c.h.b16 %v18
  %v122 = vunpack.c.l.b16 %v19
  %v123 = vunpack.c.h.b16 %v19
  %v124 = vunpack.c.l.b16 %v20
  %v125 = vunpack.c.h.b16 %v20
  %v126 = vunpack.c.l.b16 %v21
  %v127 = vunpack.c.h.b16 %v21
  %v128 = vunpack.c.l.b16 %v22
  %v129 = vunpack.c.h.b16 %v22
  %v130 = vunpack.c.l.b16 %v23
  %v131 = vunpack.c.h.b16 %v23
  %v132 = vunpack.c.l.b16 %v24
  %v133 = vunpack.c.h.b16 %v24
  %v134 = vunpack.c.l.b16 %v25
  %v135 = vunpack.c.h.b16 %v25
  %v136 = vunpack.c.l.b16 %v26
  %v137 = vunpack.c.h.b16 %v26
  %v138 = vunpack.c.l.b16 %v27
  %v139 = vunpack.c.h.b16 %v27
  %v140 = vunpack.c.l.b16 %v28
  %v141 = vunpack.c.h.b16 %v28
  %v142 = vunpack.c.l.b16 %v29
  %v143 = vunpack.c.h.b16 %v29
  %v144 = vunpack.c.l.b16 %v30
  %v145 = vunpack.c.h.b16 %v30
  %v146 = vunpack.c.l.b16 %v31
  %v147 = vunpack.c.h.b16 %v31
  %v148 = vunpack.c.l.b16 %v32
  %v149 = vunpack.c.h.b16 %v32
  %v150 = vunpack.c.l.b16 %v33
  %v151 = vunpack.c.h.b16 %v33
  %v152 = vunpack.c.l.b16 %v34
  %v153 = vunpack.c.h.b16 %v34
  %v154 = vunpack.c.l.b16 %v35
  %v155 = vunpack.c.h.b16 %v35
  %v156 = vunpack.c.l.b16 %v36
  %v157 = vunpack.c.h.b16 %v36
  %v158 = vunpack.c.l.b16 %v37
  %v159 = vunpack.c.h.b16 %v37
  %v160 = vunpack.c.l.b16 %v38
  %v161 = vunpack.c.h.b16 %v38
  %v162 = vunpack.c.l.b16 %v39
  %v163 = vunpack.c.h.b16 %v39
  %v164 = vunpack.c.l.b16 %v40
  %v165 = vunpack.c.h.b16 %v40
  %v166 = vunpack.c.l.b16 %v41
  %v167 = vunpack.c.h.b16 %v41
  %v168 = vunpack.c.l.b16 %v42
  %v169 = vunpack.c.h.b16 %v42
  %v170 = vunpack.c.l.b16 %v43
  %v171 = vunpack.c.h.b16 %v43
  %v172 = vunpack.c.l.b16 %v44
  %v173 = vunpack.c.h.b16 %v44
  %v174 = vunpack.c.l.b16 %v45
  %v175 = vunpack.c.h.b16 %v45
  %v176 = vunpack.c.l.b16 %v46
  %v177 = vunpack.c.h.b16 %v46
  %v178 = vunpack.c.l.b16 %v47
  %v179 = vunpack.c.h.b16 %v47
  %v180 = vunpack.c.l.b16 %v48
  %v181 = vunpack.c.h.b16 %v48
  %v182 = vunpack.c.l.b16 %v49
  %v183 = vunpack.c.h.b16 %v49
  %v184 = vunpack.c.l.b16 %v50
  %v185 = vunpack.c.h.b16 %v50
  %v186 = vunpack.c.l.b16 %v51
  %v187 = vunpack.c.h.b16 %v51
  %v188 = vunpack.c.l.b16 %v52
  %v189 = vunpack.c.h.b16 %v52
  %v190 = vunpack.c.l.b16 %v53
  %v191 = vunpack.c.h.b16 %v53
  %v192 = vunpack.c.l.b16 %v54
  %v193 = vunpack.c.h.b16 %v54
  %v194 = vunpack.c.l.b16 %v55
  %v195 = vunpack.c.h.b16 %v55
  %v196 = vunpack.c.l.b16 %v56
  %v197 = vunpack.c.h.b16 %v56
  %v198 = vunpack.c.l.b16 %v57
  %v199 = vunpack.c.h.b16 %v57
  %v200 = vpack.c.b16 %v124, %v120
  %v201 = vpack.c.b16 %v125, %v121
  %v202 = vpack.c.b16 %v126, %v122
  %v203 = vpack.c.b16 %v127, %v123
  %v204 = vpack.c.b16 %v132, %v128
  %v205 = vpack.c.b16 %v133, %v129
  %v206 = vpack.c.b16 %v134, %v130
  %v207 = vpack.c.b16 %v135, %v131
  %v208 = vpack.c.b16 %v140, %v136
  %v209 = vpack.c.b16 %v141, %v137
  %v210 = vpack.c.b16 %v142, %v138
  %v211 = vpack.c.b16 %v143, %v139
  %v212 = vpack.c.b16 %v148, %v144
  %v213 = vpack.c.b16 %v149, %v145
  %v214 = vpack.c.b16 %v150, %v146
  %v215 = vpack.c.b16 %v151, %v147
  %v216 = vpack.c.b16 %v156, %v152
  %v217 = vpack.c.b16 %v157, %v153
  %v218 = vpack.c.b16 %v158, %v154
  %v219 = vpack.c.b16 %v159, %v155
  %v220 = vpack.c.b16 %v164, %v160
  %v221 = vpack.c.b16 %v165, %v161
  %v222 = vpack.c.b16 %v166, %v162
  %v223 = vpack.c.b16 %v167, %v163
  %v224 = vpack.c.b16 %v172, %v168
  %v225 = vpack.c.b16 %v173, %v169
  %v226 = vpack.c.b16 %v174, %v170
  %v227 = vpack.c.b16 %v175, %v171
  %v228 = vpack.c.b16 %v180, %v176
  %v229 = vpack.c.b16 %v181, %v177
  %v230 = vpack.c.b16 %v182, %v178
  %v231 = vpack.c.b16 %v183, %v179
  %v232 = vpack.c.b16 %v188, %v184
  %v233 = vpack.c.b16 %v189, %v185
  %v234 = vpack.c.b16 %v190, %v186
  %v235 = vpack.c.b16 %v191, %v187
  %v236 = vpack.c.b16 %v196, %v192
  %v237 = vpack.c.b16 %v197, %v193
  %v238 = vpack.c.b16 %v198, %v194
  %v239 = vpack.c.b16 %v199, %v195
  %vm280 = vcmask 261120
  %v282 = vsel %vm280, %v75, 0
  %v285 = vsel %vm280, %v77, 0
  %287 = vmatprep.subr.bf16.mxu0 %v201
  %288 = vmatpush1.bf16.msra.mxu0 %v200
  %289 = vmatprep.subr.bf16.mxu0 %v205
  %290 = vmatpush1.bf16.msra.mxu0 %v204
  %291 = vmatprep.subr.bf16.mxu0 %v209
  %292 = vmatpush1.bf16.msra.mxu0 %v208
  %293 = vmatprep.subr.bf16.mxu0 %v213
  %294 = vmatpush1.bf16.msra.mxu0 %v212
  %295 = vmatprep.subr.bf16.mxu0 %v217
  %296 = vmatpush1.bf16.msra.mxu0 %v216
  %297 = vmatprep.subr.bf16.mxu0 %v221
  %298 = vmatpush1.bf16.msra.mxu0 %v220
  %299 = vmatprep.subr.bf16.mxu0 %v225
  %300 = vmatpush1.bf16.msra.mxu0 %v224
  %301 = vmatprep.subr.bf16.mxu0 %v229
  %302 = vmatpush1.bf16.msra.mxu0 %v228
  %303 = vmatprep.subr.bf16.mxu0 %v233
  %304 = vmatpush1.bf16.msra.mxu0 %v232
  %305 = vmatprep.subr.bf16.mxu0 %v237
  %306 = vmatpush1.bf16.msra.mxu0 %v236
  %307 = vmatprep.subr.bf16.mxu0 0
  %308 = vmatpush1.bf16.msra.mxu0 0
  %309 = vmatprep.subr.bf16.mxu0 0
  %310 = vmatpush1.bf16.msra.mxu0 0
  %311 = vmatprep.subr.bf16.mxu0 0
  %312 = vmatpush1.bf16.msra.mxu0 0
  %313 = vmatprep.subr.bf16.mxu0 0
  %314 = vmatpush1.bf16.msra.mxu0 0
  %315 = vmatprep.subr.bf16.mxu0 0
  %316 = vmatpush1.bf16.msra.mxu0 0
  %317 = vmatprep.subr.bf16.mxu0 0
  %318 = vmatpush1.bf16.msra.mxu0 0
  %319 = vmatprep.mubr.bf16.mxu0 %v282
  %320 = vmatmul.mubr.bf16.gmra.mrb[0].mxu0 %v74
  %v321 = vpop.f32.mrb[0].mxu0
  %v322 = vadd.f32 0.0, %v321
  %v323 = vpop.f32.mrb[0].mxu0
  %v324 = vadd.f32 0.0, %v323
  %v325 = vpop.f32.mrb[0].mxu0
  %v326 = vadd.f32 0.0, %v325
  %v327 = vpop.f32.mrb[0].mxu0
  %v328 = vadd.f32 0.0, %v327
  %329 = vmatprep.mubr.bf16.mxu0 %v285
  %330 = vmatmul.mubr.bf16.gmra.mrb[0].mxu0 %v76
  %v331 = vpop.f32.mrb[0].mxu0
  %v332 = vadd.f32 0.0, %v331
  %v333 = vpop.f32.mrb[0].mxu0
  %v334 = vadd.f32 0.0, %v333
  %v335 = vpop.f32.mrb[0].mxu0
  %v336 = vadd.f32 0.0, %v335
  %v337 = vpop.f32.mrb[0].mxu0
  %v338 = vadd.f32 0.0, %v337
  %339 = vdwg.mxu0
  %340 = vmatprep.subr.bf16.mxu0 %v203
  %341 = vmatpush1.bf16.msra.mxu0 %v202
  %342 = vmatprep.subr.bf16.mxu0 %v207
  %343 = vmatpush1.bf16.msra.mxu0 %v206
  %344 = vmatprep.subr.bf16.mxu0 %v211
  %345 = vmatpush1.bf16.msra.mxu0 %v210
  %346 = vmatprep.subr.bf16.mxu0 %v215
  %347 = vmatpush1.bf16.msra.mxu0 %v214
  %348 = vmatprep.subr.bf16.mxu0 %v219
  %349 = vmatpush1.bf16.msra.mxu0 %v218
  %350 = vmatprep.subr.bf16.mxu0 %v223
  %351 = vmatpush1.bf16.msra.mxu0 %v222
  %352 = vmatprep.subr.bf16.mxu0 %v227
  %353 = vmatpush1.bf16.msra.mxu0 %v226
  %354 = vmatprep.subr.bf16.mxu0 %v231
  %355 = vmatpush1.bf16.msra.mxu0 %v230
  %356 = vmatprep.subr.bf16.mxu0 %v235
  %357 = vmatpush1.bf16.msra.mxu0 %v234
  %358 = vmatprep.subr.bf16.mxu0 %v239
  %359 = vmatpush1.bf16.msra.mxu0 %v238
  %360 = vmatprep.subr.bf16.mxu0 0
  %361 = vmatpush1.bf16.msra.mxu0 0
  %362 = vmatprep.subr.bf16.mxu0 0
  %363 = vmatpush1.bf16.msra.mxu0 0
  %364 = vmatprep.subr.bf16.mxu0 0
  %365 = vmatpush1.bf16.msra.mxu0 0
  %366 = vmatprep.subr.bf16.mxu0 0
  %367 = vmatpush1.bf16.msra.mxu0 0
  %368 = vmatprep.subr.bf16.mxu0 0
  %369 = vmatpush1.bf16.msra.mxu0 0
  %370 = vmatprep.subr.bf16.mxu0 0
  %371 = vmatpush1.bf16.msra.mxu0 0
  %372 = vmatprep.mubr.bf16.mxu0 %v282
  %373 = vmatmul.mubr.bf16.gmra.mrb[0].mxu0 %v74
  %v374 = vpop.f32.mrb[0].mxu0
  %v375 = vadd.f32 0.0, %v374
  %v376 = vpop.f32.mrb[0].mxu0
  %v377 = vadd.f32 0.0, %v376
  %v378 = vpop.f32.mrb[0].mxu0
  %v379 = vadd.f32 0.0, %v378
  %v380 = vpop.f32.mrb[0].mxu0
  %v381 = vadd.f32 0.0, %v380
  %382 = vmatprep.mubr.bf16.mxu0 %v285
  %383 = vmatmul.mubr.bf16.gmra.mrb[0].mxu0 %v76
  %v384 = vpop.f32.mrb[0].mxu0
  %v385 = vadd.f32 0.0, %v384
  %v386 = vpop.f32.mrb[0].mxu0
  %v387 = vadd.f32 0.0, %v386
  %v388 = vpop.f32.mrb[0].mxu0
  %v389 = vadd.f32 0.0, %v388
  %v390 = vpop.f32.mrb[0].mxu0
  %v391 = vadd.f32 0.0, %v390
  %392 = vdwg.mxu0
  %v393 = vmul.f32 %v322, 0.1
  %v394 = vmul.f32 %v324, 0.1
  %v395 = vmul.f32 %v375, 0.1
  %v396 = vmul.f32 %v377, 0.1
  %v397 = vmul.f32 %v326, 0.1
  %v398 = vmul.f32 %v328, 0.1
  %v399 = vmul.f32 %v379, 0.1
  %v400 = vmul.f32 %v381, 0.1
  %v401 = vmul.f32 %v332, 0.1
  %v402 = vmul.f32 %v334, 0.1
  %v403 = vmul.f32 %v385, 0.1
  %v404 = vmul.f32 %v387, 0.1
  %v405 = vmul.f32 %v336, 0.1
  %v406 = vmul.f32 %v338, 0.1
  %v407 = vmul.f32 %v389, 0.1
  %v408 = vmul.f32 %v391, 0.1
  %v409 = vmax.f32 %v322, %v393
  %v410 = vmax.f32 %v324, %v394
  %v411 = vmax.f32 %v375, %v395
  %v412 = vmax.f32 %v377, %v396
  %v413 = vmax.f32 %v326, %v397
  %v414 = vmax.f32 %v328, %v398
  %v415 = vmax.f32 %v379, %v399
  %v416 = vmax.f32 %v381, %v400
  %v417 = vmax.f32 %v332, %v401
  %v418 = vmax.f32 %v334, %v402
  %v419 = vmax.f32 %v385, %v403
  %v420 = vmax.f32 %v387, %v404
  %v421 = vmax.f32 %v336, %v405
  %v422 = vmax.f32 %v338, %v406
  %v423 = vmax.f32 %v389, %v407
  %v424 = vmax.f32 %v391, %v408
  %v425 = vld [vmem:[%s2] sm:$0xf]
  %v426 = vpack.c.bf16 %v413, %v409
  %v427 = vpack.c.bf16 %v414, %v410
  %v428 = vpack.c.bf16 %v415, %v411
  %v429 = vpack.c.bf16 %v416, %v412
  %v430 = vpack.c.bf16 %v421, %v417
  %v431 = vpack.c.bf16 %v422, %v418
  %v432 = vpack.c.bf16 %v423, %v419
  %v433 = vpack.c.bf16 %v424, %v420
  %v435 = vsel %vm280, %v425, 0
  %437 = vmatprep.subr.bf16.mxu0 %v427
  %438 = vmatpush1.bf16.msra.mxu0 %v426
  %439 = vmatprep.subr.bf16.mxu0 %v431
  %440 = vmatpush1.bf16.msra.mxu0 %v430
  %441 = vmatprep.subr.bf16.mxu0 0
  %442 = vmatpush1.bf16.msra.mxu0 0
  %443 = vmatprep.subr.bf16.mxu0 0
  %444 = vmatpush1.bf16.msra.mxu0 0
  %445 = vmatprep.subr.bf16.mxu0 0
  %446 = vmatpush1.bf16.msra.mxu0 0
  %447 = vmatprep.subr.bf16.mxu0 0
  %448 = vmatpush1.bf16.msra.mxu0 0
  %449 = vmatprep.subr.bf16.mxu0 0
  %450 = vmatpush1.bf16.msra.mxu0 0
  %451 = vmatprep.subr.bf16.mxu0 0
  %452 = vmatpush1.bf16.msra.mxu0 0
  %453 = vmatprep.subr.bf16.mxu0 0
  %454 = vmatpush1.bf16.msra.mxu0 0
  %455 = vmatprep.subr.bf16.mxu0 0
  %456 = vmatpush1.bf16.msra.mxu0 0
  %457 = vmatprep.subr.bf16.mxu0 0
  %458 = vmatpush1.bf16.msra.mxu0 0
  %459 = vmatprep.subr.bf16.mxu0 0
  %460 = vmatpush1.bf16.msra.mxu0 0
  %461 = vmatprep.subr.bf16.mxu0 0
  %462 = vmatpush1.bf16.msra.mxu0 0
  %463 = vmatprep.subr.bf16.mxu0 0
  %464 = vmatpush1.bf16.msra.mxu0 0
  %465 = vmatprep.subr.bf16.mxu0 0
  %466 = vmatpush1.bf16.msra.mxu0 0
  %467 = vmatprep.subr.bf16.mxu0 0
  %468 = vmatpush1.bf16.msra.mxu0 0
  %469 = vmatprep.mubr.bf16.mxu0 0
  %470 = vmatmul.mubr.bf16.gmra.mrb[0].mxu0 %v435
  %v471 = vpop.f32.mrb[0].mxu0
  %v472 = vadd.f32 0.0, %v471
  %v473 = vpop.f32.mrb[0].mxu0
  %v474 = vadd.f32 0.0, %v473
  %v475 = vpop.f32.mrb[0].mxu0
  %v476 = vpop.f32.mrb[0].mxu0
  %477 = vdwg.mxu0
  %478 = vmatprep.subr.bf16.mxu0 %v429
  %479 = vmatpush1.bf16.msra.mxu0 %v428
  %480 = vmatprep.subr.bf16.mxu0 %v433
  %481 = vmatpush1.bf16.msra.mxu0 %v432
  %482 = vmatprep.subr.bf16.mxu0 0
  %483 = vmatpush1.bf16.msra.mxu0 0
  %484 = vmatprep.subr.bf16.mxu0 0
  %485 = vmatpush1.bf16.msra.mxu0 0
  %486 = vmatprep.subr.bf16.mxu0 0
  %487 = vmatpush1.bf16.msra.mxu0 0
  %488 = vmatprep.subr.bf16.mxu0 0
  %489 = vmatpush1.bf16.msra.mxu0 0
  %490 = vmatprep.subr.bf16.mxu0 0
  %491 = vmatpush1.bf16.msra.mxu0 0
  %492 = vmatprep.subr.bf16.mxu0 0
  %493 = vmatpush1.bf16.msra.mxu0 0
  %494 = vmatprep.subr.bf16.mxu0 0
  %495 = vmatpush1.bf16.msra.mxu0 0
  %496 = vmatprep.subr.bf16.mxu0 0
  %497 = vmatpush1.bf16.msra.mxu0 0
  %498 = vmatprep.subr.bf16.mxu0 0
  %499 = vmatpush1.bf16.msra.mxu0 0
  %500 = vmatprep.subr.bf16.mxu0 0
  %501 = vmatpush1.bf16.msra.mxu0 0
  %502 = vmatprep.subr.bf16.mxu0 0
  %503 = vmatpush1.bf16.msra.mxu0 0
  %504 = vmatprep.subr.bf16.mxu0 0
  %505 = vmatpush1.bf16.msra.mxu0 0
  %506 = vmatprep.subr.bf16.mxu0 0
  %507 = vmatpush1.bf16.msra.mxu0 0
  %508 = vmatprep.subr.bf16.mxu0 0
  %509 = vmatpush1.bf16.msra.mxu0 0
  %510 = vmatprep.mubr.bf16.mxu0 0
  %511 = vmatmul.mubr.bf16.gmra.mrb[0].mxu0 %v435
  %v512 = vpop.f32.mrb[0].mxu0
  %v513 = vadd.f32 0.0, %v512
  %v514 = vpop.f32.mrb[0].mxu0
  %v515 = vadd.f32 0.0, %v514
  %v516 = vpop.f32.mrb[0].mxu0
  %v517 = vpop.f32.mrb[0].mxu0
  %518 = vdwg.mxu0
  %v519 = vld [vmem:[%s3] sm:$0xff]
  %v520 = vunpack.c.l.bf16 %v18
  %v521 = vunpack.c.h.bf16 %v18
  %v522 = vunpack.c.l.bf16 %v19
  %v523 = vunpack.c.h.bf16 %v19
  %v524 = vadd.f32 %v520, %v521
  %525 = vadd.xlane.f32.xlu0 %v524
  %v526 = vpop.xlane.xlu0 %525
  %v527 = vrcp.pop 256.0
  %v528 = vmul.f32 %v526, %v527
  %v529 = vadd.f32 %v522, %v523
  %530 = vadd.xlane.f32.xlu0 %v529
  %v531 = vpop.xlane.xlu0 %530
  %v532 = vmul.f32 %v531, %v527
  %vm533 = vcmask 7168
  %v534 = vsel %vm533, %v528, %v532
  %536 = vset.pattern.permute.xlu0 8
  %537 = vperm.xlu0 %536, %v519
  %v538 = vpop.permute.xlu0 %537
  %vm540 = vcmask 64512
  %v541 = vsel %vm540, %v519, 0
  %543 = vmatprep.subr.mxu0 0.0
  %544 = vmatpush1.msra.mxu0 %v534
  %545 = vmatprep.subr.mxu0 0.0
  %546 = vmatpush1.msra.mxu0 0.0
  %547 = vmatprep.subr.mxu0 0.0
  %548 = vmatpush1.msra.mxu0 0.0
  %549 = vmatprep.subr.mxu0 0.0
  %550 = vmatpush1.msra.mxu0 0.0
  %551 = vmatprep.subr.mxu0 0.0
  %552 = vmatpush1.msra.mxu0 0.0
  %553 = vmatprep.subr.mxu0 0.0
  %554 = vmatpush1.msra.mxu0 0.0
  %555 = vmatprep.subr.mxu0 0.0
  %556 = vmatpush1.msra.mxu0 0.0
  %557 = vmatprep.subr.mxu0 0.0
  %558 = vmatpush1.msra.mxu0 0.0
  %559 = vmatprep.subr.mxu0 0.0
  %560 = vmatpush1.msra.mxu0 0.0
  %561 = vmatprep.subr.mxu0 0.0
  %562 = vmatpush1.msra.mxu0 0.0
  %563 = vmatprep.subr.mxu0 0.0
  %564 = vmatpush1.msra.mxu0 0.0
  %565 = vmatprep.subr.mxu0 0.0
  %566 = vmatpush1.msra.mxu0 0.0
  %567 = vmatprep.subr.mxu0 0.0
  %568 = vmatpush1.msra.mxu0 0.0
  %569 = vmatprep.subr.mxu0 0.0
  %570 = vmatpush1.msra.mxu0 0.0
  %571 = vmatprep.subr.mxu0 0.0
  %572 = vmatpush1.msra.mxu0 0.0
  %573 = vmatprep.subr.mxu0 0.0
  %574 = vmatpush1.msra.mxu0 0.0
  %575 = vmatprep.subr.mxu0 0.0
  %576 = vmatpush1.msra.mxu0 0.0
  %577 = vmatprep.subr.mxu0 0.0
  %578 = vmatpush1.msra.mxu0 0.0
  %579 = vmatprep.subr.mxu0 0.0
  %580 = vmatpush1.msra.mxu0 0.0
  %581 = vmatprep.subr.mxu0 0.0
  %582 = vmatpush1.msra.mxu0 0.0
  %583 = vmatprep.subr.mxu0 0.0
  %584 = vmatpush1.msra.mxu0 0.0
  %585 = vmatprep.subr.mxu0 0.0
  %586 = vmatpush1.msra.mxu0 0.0
  %587 = vmatprep.subr.mxu0 0.0
  %588 = vmatpush1.msra.mxu0 0.0
  %589 = vmatprep.subr.mxu0 0.0
  %590 = vmatpush1.msra.mxu0 0.0
  %591 = vmatprep.subr.mxu0 0.0
  %592 = vmatpush1.msra.mxu0 0.0
  %593 = vmatprep.subr.mxu0 0.0
  %594 = vmatpush1.msra.mxu0 0.0
  %595 = vmatprep.subr.mxu0 0.0
  %596 = vmatpush1.msra.mxu0 0.0
  %597 = vmatprep.subr.mxu0 0.0
  %598 = vmatpush1.msra.mxu0 0.0
  %599 = vmatprep.subr.mxu0 0.0
  %600 = vmatpush1.msra.mxu0 0.0
  %601 = vmatprep.subr.mxu0 0.0
  %602 = vmatpush1.msra.mxu0 0.0
  %603 = vmatprep.subr.mxu0 0.0
  %604 = vmatpush1.msra.mxu0 0.0
  %605 = vmatprep.subr.mxu0 0.0
  %606 = vmatpush1.msra.mxu0 0.0
  %607 = vmatprep.mubr.f32.mxu0 0.0
  %608 = vmatmul.mubr.f32.gmra.mrb[0].mxu0 %v541
  %v609 = vpop.f32.mrb[0].mxu0
  %v610 = vadd.f32 %v538, %v609
  %v611 = vpop.f32.mrb[0].mxu0
  %612 = vdwg.mxu0
  %v613 = vmul.f32 %v610, 0.1
  %v614 = vmax.f32 %v610, %v613
  %615 = vset.pattern.permute.xlu0 17
  %616 = vperm.xlu0 %615, %v519
  %v617 = vpop.permute.xlu0 %616
  %619 = vrot.lane.b32.xlu0 %v519, 119
  %v620 = vpop.permute.xlu0 %619
  %v621 = vsel %vm540, %v620, 0
  %623 = vmatprep.subr.mxu0 0.0
  %624 = vmatpush1.msra.mxu0 %v614
  %625 = vmatprep.subr.mxu0 0.0
  %626 = vmatpush1.msra.mxu0 0.0
  %627 = vmatprep.subr.mxu0 0.0
  %628 = vmatpush1.msra.mxu0 0.0
  %629 = vmatprep.subr.mxu0 0.0
  %630 = vmatpush1.msra.mxu0 0.0
  %631 = vmatprep.subr.mxu0 0.0
  %632 = vmatpush1.msra.mxu0 0.0
  %633 = vmatprep.subr.mxu0 0.0
  %634 = vmatpush1.msra.mxu0 0.0
  %635 = vmatprep.subr.mxu0 0.0
  %636 = vmatpush1.msra.mxu0 0.0
  %637 = vmatprep.subr.mxu0 0.0
  %638 = vmatpush1.msra.mxu0 0.0
  %639 = vmatprep.subr.mxu0 0.0
  %640 = vmatpush1.msra.mxu0 0.0
  %641 = vmatprep.subr.mxu0 0.0
  %642 = vmatpush1.msra.mxu0 0.0
  %643 = vmatprep.subr.mxu0 0.0
  %644 = vmatpush1.msra.mxu0 0.0
  %645 = vmatprep.subr.mxu0 0.0
  %646 = vmatpush1.msra.mxu0 0.0
  %647 = vmatprep.subr.mxu0 0.0
  %648 = vmatpush1.msra.mxu0 0.0
  %649 = vmatprep.subr.mxu0 0.0
  %650 = vmatpush1.msra.mxu0 0.0
  %651 = vmatprep.subr.mxu0 0.0
  %652 = vmatpush1.msra.mxu0 0.0
  %653 = vmatprep.subr.mxu0 0.0
  %654 = vmatpush1.msra.mxu0 0.0
  %655 = vmatprep.subr.mxu0 0.0
  %656 = vmatpush1.msra.mxu0 0.0
  %657 = vmatprep.subr.mxu0 0.0
  %658 = vmatpush1.msra.mxu0 0.0
  %659 = vmatprep.subr.mxu0 0.0
  %660 = vmatpush1.msra.mxu0 0.0
  %661 = vmatprep.subr.mxu0 0.0
  %662 = vmatpush1.msra.mxu0 0.0
  %663 = vmatprep.subr.mxu0 0.0
  %664 = vmatpush1.msra.mxu0 0.0
  %665 = vmatprep.subr.mxu0 0.0
  %666 = vmatpush1.msra.mxu0 0.0
  %667 = vmatprep.subr.mxu0 0.0
  %668 = vmatpush1.msra.mxu0 0.0
  %669 = vmatprep.subr.mxu0 0.0
  %670 = vmatpush1.msra.mxu0 0.0
  %671 = vmatprep.subr.mxu0 0.0
  %672 = vmatpush1.msra.mxu0 0.0
  %673 = vmatprep.subr.mxu0 0.0
  %674 = vmatpush1.msra.mxu0 0.0
  %675 = vmatprep.subr.mxu0 0.0
  %676 = vmatpush1.msra.mxu0 0.0
  %677 = vmatprep.subr.mxu0 0.0
  %678 = vmatpush1.msra.mxu0 0.0
  %679 = vmatprep.subr.mxu0 0.0
  %680 = vmatpush1.msra.mxu0 0.0
  %681 = vmatprep.subr.mxu0 0.0
  %682 = vmatpush1.msra.mxu0 0.0
  %683 = vmatprep.subr.mxu0 0.0
  %684 = vmatpush1.msra.mxu0 0.0
  %685 = vmatprep.subr.mxu0 0.0
  %686 = vmatpush1.msra.mxu0 0.0
  %687 = vmatprep.mubr.f32.mxu0 0.0
  %688 = vmatmul.mubr.f32.gmra.mrb[0].mxu0 %v621
  %v689 = vpop.f32.mrb[0].mxu0
  %v690 = vadd.f32 %v617, %v689
  %v691 = vpop.f32.mrb[0].mxu0
  %692 = vdwg.mxu0
  %694 = vset.pattern.permute.xlu0 0
  %695 = vperm.xlu0 %694, %v690
  %v696 = vpop.permute.xlu0 %695
  %v698 = vadd.f32 %v472, %v696
  %v699 = vadd.f32 %v474, %v696
  %700 = vst [vmem:[%s4] sm:$0xff] %v698
  %701 = vst [vmem:[%s4 + $0x8] sm:$0xff] %v699
  %702 = vset.pattern.permute.xlu0 1
  %703 = vperm.xlu0 %702, %v690
  %v704 = vpop.permute.xlu0 %703
  %v706 = vadd.f32 %v513, %v704
  %v707 = vadd.f32 %v515, %v704
  %708 = vst [vmem:[%s4 + $0x10] sm:$0xff] %v706
  %709 = vst [vmem:[%s4 + $0x18] sm:$0xff] %v707
  // Predicated region
  $region18: #{aspp_decoder_pallas.1} parent=0 // pred_check
    _
  $region19: #{aspp_decoder_pallas.1} parent=0 // pred_check_branch
    %711 = sbr.rel (0) target = $region21
  $region20: #{aspp_decoder_pallas.1} parent=0 // pred_region
    _
  $region21: #{aspp_decoder_pallas.1} parent=0 // pred_fallthru
    _
  // Predicated region
  $region22: #{aspp_decoder_pallas.1} parent=0 // pred_check
    _
  $region23: #{aspp_decoder_pallas.1} parent=0 // pred_check_branch
    %713 = sbr.rel (0) target = $region25
  $region24: #{aspp_decoder_pallas.1} parent=0 // pred_region
    _
  $region25: #{aspp_decoder_pallas.1} parent=0 // pred_fallthru
    _

</llo_original>
